<compile_context>
chip_gen: v7x
topology: tpu7x:2x2x1
jax: 0.10.0
libtpu: 0.0.40
codegen_flags: <defaults>
</compile_context>

<pallas_src>
import functools

import jax
import jax.numpy as jnp
from jax.experimental import pallas as pl
from jax.experimental.pallas import tpu as pltpu


def _round_up(n, m):
    return ((n + m - 1) // m) * m


def _pick_tile(dim, max_tile):
    """Largest power-of-two multiple of 8 (<= max_tile) dividing dim, else dim (full)."""
    best = None
    t = 8
    while t <= min(dim, max_tile):
        if dim % t == 0:
            best = t
        t *= 2
    return best if best is not None else dim


# --------------------------------------------------------------------------- #
# Kernels
# --------------------------------------------------------------------------- #
def _cls_kernel(x_ref, w_ref, b_ref, o_ref):
    """x_ref: [TILE_B, s_blk, D] (only the first tokens were DMA'd); o: [TILE_B, C_pad]."""
    feat = x_ref[:, 0, :]                                   # CLS token, native dtype
    out = jnp.dot(feat, w_ref[...], preferred_element_type=jnp.float32)
    o_ref[...] = (out + b_ref[...].astype(jnp.float32)).astype(o_ref.dtype)


def _pooled_kernel(x_ref, w_ref, b_ref, o_ref, acc_ref, cls_ref, *,
                   head_type, embed_dim, inv_nm1):
    """AVG / Hyber: accumulate token sum over S tiles, finalize on the last step."""
    s = pl.program_id(1)
    n_s = pl.num_programs(1)

    # Full-tile aligned reduction with an f32 accumulator (no x[:, 1:] slice,
    # no whole-tile upcast).
    tile_sum = jnp.sum(x_ref[...], axis=1, dtype=jnp.float32)      # [TILE_B, D]

    @pl.when(s == 0)
    def _init():
        token0 = x_ref[:, 0, :].astype(jnp.float32)
        acc_ref[...] = tile_sum - token0                            # sum over tokens 1:
        if head_type == "Hyber":
            cls_ref[...] = token0

    @pl.when(s > 0)
    def _accum():
        acc_ref[...] += tile_sum

    @pl.when(s == n_s - 1)
    def _finalize():
        avg = acc_ref[...] * inv_nm1                                # mean over tokens 1:
        if head_type == "AVG":
            out = jnp.dot(avg, w_ref[...], preferred_element_type=jnp.float32)
        else:  # Hyber: cat([cls, avg]) @ W == cls @ W[:D] + avg @ W[D:]
            out = (jnp.dot(cls_ref[...], w_ref[pl.ds(0, embed_dim), :],
                           preferred_element_type=jnp.float32)
                   + jnp.dot(avg, w_ref[pl.ds(embed_dim, embed_dim), :],
                             preferred_element_type=jnp.float32))
        o_ref[...] = (out + b_ref[...].astype(jnp.float32)).astype(o_ref.dtype)


# --------------------------------------------------------------------------- #
# Wrapper
# --------------------------------------------------------------------------- #
def classification_head(x, w, b, head_type="CLS"):
    """x: [B, S, D], w: [D_in, C], b: [C]  ->  logits [B, C] float32."""
    assert head_type in ("CLS", "AVG", "Hyber")
    B, S, D = x.shape
    D_in, C = w.shape
    assert D_in == (2 * D if head_type == "Hyber" else D)
    if head_type != "CLS":
        assert S > 1, "AVG/Hyber pooling needs at least one non-CLS token"

    # Lane-dense output / full MXU columns: pad classes to a multiple of 128.
    C_pad = _round_up(C, 128)
    if C_pad != C:
        w = jnp.pad(w, ((0, 0), (0, C_pad - C)))
        b = jnp.pad(b, (0, C_pad - C))
    b2 = b.reshape(1, C_pad)

    TILE_B = _pick_tile(B, 256)
    nb = B // TILE_B
    itemsize = x.dtype.itemsize
    vmem_limit = 32 * 1024 * 1024      # safe scoped limit on v5e/v6e/v7x

    if head_type == "CLS":
        # Fetch only the first min(S, 8) tokens per batch tile via the BlockSpec
        # (8 = sublane tiling granularity), not the full [B, S, D] tensor.
        s_blk = min(S, 8)
        cost = pl.CostEstimate(
            flops=2 * B * D_in * C_pad,
            transcendentals=0,
            bytes_accessed=(B * s_blk * D * itemsize
                            + D_in * C_pad * w.dtype.itemsize
                            + B * C_pad * 4),
        )
        out = pl.pallas_call(
            _cls_kernel,
            out_shape=jax.ShapeDtypeStruct((B, C_pad), jnp.float32),
            grid=(nb,),
            in_specs=[
                pl.BlockSpec((TILE_B, s_blk, D), lambda i: (i, 0, 0)),
                pl.BlockSpec((D_in, C_pad), lambda i: (0, 0)),
                pl.BlockSpec((1, C_pad), lambda i: (0, 0)),
            ],
            out_specs=pl.BlockSpec((TILE_B, C_pad), lambda i: (i, 0)),
            compiler_params=pltpu.CompilerParams(
                dimension_semantics=("parallel",),
                vmem_limit_bytes=vmem_limit,
            ),
            cost_estimate=cost,
        )(x, w, b2)
    else:
        # S reduction axis: cap the x tile at ~8 MiB so 2 buffers + weights +
        # accumulators stay well under v7x's 64 MiB VMEM.
        budget = 8 * 1024 * 1024
        max_s = max(8, budget // max(1, TILE_B * D * itemsize))
        TILE_S = _pick_tile(S, max_s)
        ns = S // TILE_S if S % TILE_S == 0 else 1   # _pick_tile guarantees exact tiling
        kernel = functools.partial(_pooled_kernel, head_type=head_type,
                                   embed_dim=D, inv_nm1=1.0 / (S - 1))
        cost = pl.CostEstimate(
            flops=2 * B * D_in * C_pad + B * S * D,
            transcendentals=0,
            bytes_accessed=(B * S * D * itemsize
                            + D_in * C_pad * w.dtype.itemsize
                            + B * C_pad * 4),
        )
        out = pl.pallas_call(
            kernel,
            out_shape=jax.ShapeDtypeStruct((B, C_pad), jnp.float32),
            grid=(nb, ns),
            in_specs=[
                pl.BlockSpec((TILE_B, TILE_S, D), lambda i, s: (i, s, 0)),
                pl.BlockSpec((D_in, C_pad), lambda i, s: (0, 0)),
                pl.BlockSpec((1, C_pad), lambda i, s: (0, 0)),
            ],
            out_specs=pl.BlockSpec((TILE_B, C_pad), lambda i, s: (i, 0)),
            scratch_shapes=[
                pltpu.VMEM((TILE_B, D), jnp.float32),   # pooled-sum accumulator
                pltpu.VMEM((TILE_B, D), jnp.float32),   # CLS token (Hyber only)
            ],
            compiler_params=pltpu.CompilerParams(
                dimension_semantics=("parallel", "arbitrary"),
                vmem_limit_bytes=vmem_limit,
            ),
            cost_estimate=cost,
        )(x, w, b2)

    return out[:, :C] if C_pad != C else out


# --------------------------------------------------------------------------- #
# Reference + test
# --------------------------------------------------------------------------- #
def _reference(x, w, b, head_type):
    if head_type == "CLS":
        feat = x[:, 0]
    elif head_type == "AVG":
        feat = x[:, 1:].mean(axis=1)
    else:
        feat = jnp.concatenate([x[:, 0], x[:, 1:].mean(axis=1)], axis=-1)
    return feat @ w + b


def _init_linear(key, d_in, d_out):
    # Deterministic init mimicking torch.nn.Linear's uniform(-1/sqrt(in), 1/sqrt(in)).
    kw, kb = jax.random.split(key)
    bound = 1.0 / (d_in ** 0.5)
    w = jax.random.uniform(kw, (d_in, d_out), jnp.float32, -bound, bound)
    b = jax.random.uniform(kb, (d_out,), jnp.float32, -bound, bound)
    return w, b


if __name__ == "__main__":
    key = jax.random.PRNGKey(0)
    k_x, k_h, k_hyb = jax.random.split(key, 3)

    B, S, D, C = 2, 8, 32, 16   # batch, seq (token 0 = CLS), embed_dim, num_classes
    x = jax.random.normal(k_x, (B, S, D), jnp.float32)

    w, b = _init_linear(k_h, D, C)            # head for 'CLS' and 'AVG'
    w2, b2 = _init_linear(k_hyb, 2 * D, C)    # head for 'Hyber'

    for head_type, (wi, bi) in (("CLS", (w, b)), ("AVG", (w, b)), ("Hyber", (w2, b2))):
        out = jax.block_until_ready(classification_head(x, wi, bi, head_type=head_type))
        ref = _reference(x, wi, bi, head_type)
        assert out.shape == (B, C), (head_type, out.shape)
        assert jnp.allclose(out, ref, atol=1e-5, rtol=1e-5), head_type

    print("KERNEL_OK")
</pallas_src>

<mosaic_0001>
module attributes {stable_mosaic.version = 11 : i64} {
  func.func @_cls_kernel(%arg0: i32, %arg1: memref<2x8x32xf32, #tpu.memory_space<vmem>>, %arg2: memref<32x128xf32, #tpu.memory_space<vmem>>, %arg3: memref<1x128xf32, #tpu.memory_space<vmem>>, %arg4: memref<2x128xf32, #tpu.memory_space<vmem>>) attributes {dimension_semantics = [#tpu.dimension_semantics<parallel>], iteration_bounds = array<i64: 1>, scalar_prefetch = 0 : i64, scratch_operands = 0 : i64, tpu.core_type = #tpu.core_type<tc>, window_params = [{transform_indices = @transform_0, window_bounds = array<i64: 2, 8, 32>}, {pipeline_mode = #tpu.pipeline_mode<synchronous>, transform_indices = @transform_1, window_bounds = array<i64: 32, 128>}, {pipeline_mode = #tpu.pipeline_mode<synchronous>, transform_indices = @transform_2, window_bounds = array<i64: 1, 128>}, {transform_indices = @transform_3, window_bounds = array<i64: 2, 128>}]} {
    %c0 = arith.constant 0 : index
    %c0_0 = arith.constant 0 : index
    %c0_1 = arith.constant 0 : index
    %0 = vector.load %arg1[%c0, %c0_0, %c0_1] : memref<2x8x32xf32, #tpu.memory_space<vmem>>, vector<2x1x32xf32>
    %1 = vector.shape_cast %0 : vector<2x1x32xf32> to vector<2x32xf32>
    %c0_2 = arith.constant 0 : index
    %c0_3 = arith.constant 0 : index
    %2 = vector.load %arg2[%c0_2, %c0_3] : memref<32x128xf32, #tpu.memory_space<vmem>>, vector<32x128xf32>
    %cst = arith.constant dense<0.000000e+00> : vector<2x128xf32>
    %3 = tpu.matmul %1, %2, %cst {dimension_numbers = #tpu.dot_dimension_numbers<[1], [0], [0], [1], [0, 0, 1, 1], [], []>} : vector<2x32xf32>, vector<32x128xf32>, vector<2x128xf32> -> vector<2x128xf32>
    %c0_4 = arith.constant 0 : index
    %c0_5 = arith.constant 0 : index
    %4 = vector.load %arg3[%c0_4, %c0_5] : memref<1x128xf32, #tpu.memory_space<vmem>>, vector<1x128xf32>
    %5 = vector.broadcast %4 : vector<1x128xf32> to vector<2x128xf32>
    %6 = arith.addf %3, %5 : vector<2x128xf32>
    %c0_6 = arith.constant 0 : index
    %c0_7 = arith.constant 0 : index
    %7 = vector.load %arg4[%c0_6, %c0_7] : memref<2x128xf32, #tpu.memory_space<vmem>>, vector<2x128xf32>
    tpu.vector_store %arg4[%c0_6, %c0_7], %6 {strides = array<i32>} : memref<2x128xf32, #tpu.memory_space<vmem>>, vector<2x128xf32>,
    return
  }
  func.func @transform_0(%arg0: i32) -> (i32, i32, i32) {
    %c0_i32 = arith.constant 0 : i32
    %c0_i32_0 = arith.constant 0 : i32
    %c0_i32_1 = arith.constant 0 : i32
    return %arg0, %c0_i32, %c0_i32_0 : i32, i32, i32
  }
  func.func @transform_1(%arg0: i32) -> (i32, i32) {
    %c0_i32 = arith.constant 0 : i32
    %c0_i32_0 = arith.constant 0 : i32
    %c0_i32_1 = arith.constant 0 : i32
    return %c0_i32, %c0_i32_0 : i32, i32
  }
  func.func @transform_2(%arg0: i32) -> (i32, i32) {
    %c0_i32 = arith.constant 0 : i32
    %c0_i32_0 = arith.constant 0 : i32
    %c0_i32_1 = arith.constant 0 : i32
    return %c0_i32, %c0_i32_0 : i32, i32
  }
  func.func @transform_3(%arg0: i32) -> (i32, i32) {
    %c0_i32 = arith.constant 0 : i32
    %c0_i32_0 = arith.constant 0 : i32
    return %arg0, %c0_i32 : i32, i32
  }
}

</mosaic_0001>

<llo_original>
// kernel: tpu_custom_call.1
$region0: #{tpu_custom_call.1}
  #allocation0 [shape = 'u32[]', space=smem, size = 0x4, offset = 0x4, fixed_abs, tag = 'smem constant byte address 0x4 - core index']
  #allocation1 [shape = 'u32[144,128]{1,0:T(1,128)}', space=vmem, size = 0x12000, scoped, tag = 'internal scratch']
  %s0 = inlined_call_operand.hbm [shape: f32[2,8,32], index: 0, kind: input, shape index: {}]
  %s1 = inlined_call_operand.hbm [shape: f32[32,128], index: 1, kind: input, shape index: {}]
  %s2 = inlined_call_operand.vmem [shape: f32[1,128], index: 2, kind: input, shape index: {}]
  %s3 = inlined_call_operand.hbm [shape: f32[2,128], index: 3, kind: output, shape index: {}]
  %s4 = sld [smem:[#allocation0]]
  $region30: #{tpu_custom_call.1} parent=0
    _
  %s6 = ssub.s32 1, %s4
  %s7 = scalar_select 0, %s6, %s4
  $region1: #{tpu_custom_call.1} parent=0
    #allocation2 [shape = 'u8[8192]{0}', space=vmem, size = 0x2000, scoped, tag = 'input window, operand 0, single buffered']
    #allocation3 [shape = 's32[1]{0}', space=sflag, size = 0x4, scoped, tag = 'scoped memory for tpu_custom_call.1']
    #allocation4 [shape = 's32[1]{0}', space=sflag, size = 0x4, scoped, tag = 'scoped memory for tpu_custom_call.1']
    #allocation5 [shape = 'u8[16384]{0}', space=vmem, size = 0x4000, scoped, tag = 'input window, operand 1, single buffered']
    #allocation6 [shape = 's32[1]{0}', space=sflag, size = 0x4, scoped, tag = 'scoped memory for tpu_custom_call.1']
    #allocation7 [shape = 'u8[1024]{0}', space=vmem, size = 0x400, scoped, tag = 'output window, operand 0, single buffered']
    %8 = vsyncpa [#allocation3], 0
    %9 = vsyncpa [#allocation6], 0
    %10 = vsyncpa [#allocation4], 0
    // Predicated region
    $region2: #{tpu_custom_call.1} parent=1 // pred_check
      _
    $region3: #{tpu_custom_call.1} parent=1 // pred_check_branch
      %12 = sbr.rel (0) target = $region5
    $region4: #{tpu_custom_call.1} parent=1 // pred_region
      %s14 = ssub.s32 256, 256
      %15 = vsyncadd [#allocation3], %s14
      %s16 = sshll.u32 [#allocation2], 4
      %s17 = int_to_ptr.vmem [resolvable:$true] %s16
      %22 = dma.hbm_to_vmem [thread:$0]  %s0, 256, %s17, [#allocation3], 128, 128, 8
    $region5: #{tpu_custom_call.1} parent=1 // pred_fallthru
      _
    // Predicated region
    $region6: #{tpu_custom_call.1} parent=1 // pred_check
      _
    $region7: #{tpu_custom_call.1} parent=1 // pred_check_branch
      %24 = sbr.rel (0) target = $region9
    $region8: #{tpu_custom_call.1} parent=1 // pred_region
      %s26 = ssub.s32 512, 512
      %27 = vsyncadd [#allocation6], %s26
      %s28 = sshll.u32 [#allocation5], 4
      %s29 = int_to_ptr.vmem [resolvable:$true] %s28
      %34 = dma.hbm_to_vmem [thread:$0]  %s1, 512, %s29, [#allocation6], 128, 128, 8
    $region9: #{tpu_custom_call.1} parent=1 // pred_fallthru
      _
    // Predicated region
    $region10: #{tpu_custom_call.1} parent=1 // pred_check
      _
    $region11: #{tpu_custom_call.1} parent=1 // pred_check_branch
      %36 = sbr.rel (0) target = $region13
    $region12: #{tpu_custom_call.1} parent=1 // pred_region
      _
    $region13: #{tpu_custom_call.1} parent=1 // pred_fallthru
      _
    // Predicated region
    $region14: #{tpu_custom_call.1} parent=1 // pred_check
      _
    $region15: #{tpu_custom_call.1} parent=1 // pred_check_branch
      %38 = sbr.rel (0) target = $region17
    $region16: #{tpu_custom_call.1} parent=1 // pred_region
      %39 = dma.done [#allocation3], 256
    $region17: #{tpu_custom_call.1} parent=1 // pred_fallthru
      _
    // Predicated region
    $region18: #{tpu_custom_call.1} parent=1 // pred_check
      _
    $region19: #{tpu_custom_call.1} parent=1 // pred_check_branch
      %41 = sbr.rel (0) target = $region21
    $region20: #{tpu_custom_call.1} parent=1 // pred_region
      %42 = dma.done [#allocation6], 512
    $region21: #{tpu_custom_call.1} parent=1 // pred_fallthru
      _
    %v43 = vld [vmem:[#allocation2] sm:$0x1]
    %v44 = vld [vmem:[#allocation2 + $0x8] sm:$0x1]
    %v45 = vld [vmem:[#allocation5] sm:$0xff]
    %v46 = vld [vmem:[#allocation5 + $0x8] sm:$0xff]
    %v47 = vld [vmem:[#allocation5 + $0x10] sm:$0xff]
    %v48 = vld [vmem:[#allocation5 + $0x18] sm:$0xff]
    %v49 = vld [vmem:[%s2] sm:$0x1]
    %v51 = vlaneseq
    %v52 = vshrl.u32 %v51, 7
    %v53 = vsub.s32 0, %v52
    %v54 = vrot.slane %v49, %v53
    %v58 = vrot.slane %v44, 7
    %vm59 = vcmask 1041409
    %v60 = vsel %vm59, %v58, %v43
    %vm61 = vcmask 261120
    %v62 = vsel %vm61, %v60, 0
    %64 = vmatprep.subr.mxu0 0.0
    %65 = vmatpush1.msra.mxu0 %v45
    %66 = vmatprep.subr.mxu0 0.0
    %67 = vmatpush1.msra.mxu0 %v46
    %68 = vmatprep.subr.mxu0 0.0
    %69 = vmatpush1.msra.mxu0 %v47
    %70 = vmatprep.subr.mxu0 0.0
    %71 = vmatpush1.msra.mxu0 %v48
    %72 = vmatprep.subr.mxu0 0.0
    %73 = vmatpush1.msra.mxu0 0.0
    %74 = vmatprep.subr.mxu0 0.0
    %75 = vmatpush1.msra.mxu0 0.0
    %76 = vmatprep.subr.mxu0 0.0
    %77 = vmatpush1.msra.mxu0 0.0
    %78 = vmatprep.subr.mxu0 0.0
    %79 = vmatpush1.msra.mxu0 0.0
    %80 = vmatprep.subr.mxu0 0.0
    %81 = vmatpush1.msra.mxu0 0.0
    %82 = vmatprep.subr.mxu0 0.0
    %83 = vmatpush1.msra.mxu0 0.0
    %84 = vmatprep.subr.mxu0 0.0
    %85 = vmatpush1.msra.mxu0 0.0
    %86 = vmatprep.subr.mxu0 0.0
    %87 = vmatpush1.msra.mxu0 0.0
    %88 = vmatprep.subr.mxu0 0.0
    %89 = vmatpush1.msra.mxu0 0.0
    %90 = vmatprep.subr.mxu0 0.0
    %91 = vmatpush1.msra.mxu0 0.0
    %92 = vmatprep.subr.mxu0 0.0
    %93 = vmatpush1.msra.mxu0 0.0
    %94 = vmatprep.subr.mxu0 0.0
    %95 = vmatpush1.msra.mxu0 0.0
    %96 = vmatprep.subr.mxu0 0.0
    %97 = vmatpush1.msra.mxu0 0.0
    %98 = vmatprep.subr.mxu0 0.0
    %99 = vmatpush1.msra.mxu0 0.0
    %100 = vmatprep.subr.mxu0 0.0
    %101 = vmatpush1.msra.mxu0 0.0
    %102 = vmatprep.subr.mxu0 0.0
    %103 = vmatpush1.msra.mxu0 0.0
    %104 = vmatprep.subr.mxu0 0.0
    %105 = vmatpush1.msra.mxu0 0.0
    %106 = vmatprep.subr.mxu0 0.0
    %107 = vmatpush1.msra.mxu0 0.0
    %108 = vmatprep.subr.mxu0 0.0
    %109 = vmatpush1.msra.mxu0 0.0
    %110 = vmatprep.subr.mxu0 0.0
    %111 = vmatpush1.msra.mxu0 0.0
    %112 = vmatprep.subr.mxu0 0.0
    %113 = vmatpush1.msra.mxu0 0.0
    %114 = vmatprep.subr.mxu0 0.0
    %115 = vmatpush1.msra.mxu0 0.0
    %116 = vmatprep.subr.mxu0 0.0
    %117 = vmatpush1.msra.mxu0 0.0
    %118 = vmatprep.subr.mxu0 0.0
    %119 = vmatpush1.msra.mxu0 0.0
    %120 = vmatprep.subr.mxu0 0.0
    %121 = vmatpush1.msra.mxu0 0.0
    %122 = vmatprep.subr.mxu0 0.0
    %123 = vmatpush1.msra.mxu0 0.0
    %124 = vmatprep.subr.mxu0 0.0
    %125 = vmatpush1.msra.mxu0 0.0
    %126 = vmatprep.subr.mxu0 0.0
    %127 = vmatpush1.msra.mxu0 0.0
    %128 = vmatprep.mubr.f32.mxu0 0.0
    %129 = vmatmul.mubr.f32.gmra.mrb[0].mxu0 %v62
    %v130 = vpop.f32.mrb[0].mxu0
    %v131 = vadd.f32 %v54, %v130
    %v132 = vpop.f32.mrb[0].mxu0
    %133 = vdwg.mxu0
    %134 = vst [vmem:[#allocation7] sm:$0x3] %v131
    // Predicated region
    $region22: #{tpu_custom_call.1} parent=1 // pred_check
      _
    $region23: #{tpu_custom_call.1} parent=1 // pred_check_branch
      %136 = sbr.rel (0) target = $region25
    $region24: #{tpu_custom_call.1} parent=1 // pred_region
      %s138 = ssub.s32 32, 32
      %139 = vsyncadd [#allocation4], %s138
      %s141 = sshll.u32 [#allocation7], 4
      %s142 = int_to_ptr.vmem [resolvable:$true] %s141
      %144 = dma.vmem_to_hbm [thread:$0]  %s142, 32, %s3, [#allocation4]
    $region25: #{tpu_custom_call.1} parent=1 // pred_fallthru
      _
    // Predicated region
    $region26: #{tpu_custom_call.1} parent=1 // pred_check
      _
    $region27: #{tpu_custom_call.1} parent=1 // pred_check_branch
      %146 = sbr.rel (0) target = $region29
    $region28: #{tpu_custom_call.1} parent=1 // pred_region
      %147 = dma.done [#allocation4], 32
    $region29: #{tpu_custom_call.1} parent=1 // pred_fallthru
      _
    %148 = vsyncpa [#allocation3], 1
    %149 = vsyncpa [#allocation6], 1
    %150 = vsyncpa [#allocation4], 1

</llo_original>
